<compile_context>
chip_gen: v6e
topology: v6e:2x2x1
jax: 0.10.0
libtpu: 0.0.40
codegen_flags: <defaults>
</compile_context>

<pallas_src>
import jax
import jax.numpy as jnp
from jax.experimental import pallas as pl
from jax.experimental.pallas import tpu as pltpu

ALPHA = 0.6
EPS = 1e-6
_PAD_LOGIT = -1e4                     # tanh saturates -> sigmoid == 0 exactly
_VMEM_WORKSET_BUDGET = 40 << 20       # inputs (double-buffered) + f32 temporaries
_MAX_IN_BLOCK_BYTES = 8 << 20         # per-step native-dtype input block


def _combined_loss_kernel(out_ref, tgt_ref, bce_ref, inter_ref, union_ref):
    k = pl.program_id(2)              # H-tile (reduction) axis, innermost

    @pl.when(k == 0)
    def _():
        bce_ref[...] = jnp.zeros_like(bce_ref)
        inter_ref[...] = jnp.zeros_like(inter_ref)
        union_ref[...] = jnp.zeros_like(union_ref)

    # Cast to f32 *after* the (possibly bf16 / int8) block is already in VMEM.
    x = out_ref[0].astype(jnp.float32)        # (C, TH, TW) logits
    t = tgt_ref[...].astype(jnp.float32)      # (1, TH, TW) -> broadcasts over C

    # Exactly two EUP pushes per element: one tanh + one log.
    th = jnp.tanh(0.5 * x)                    # tanh(x/2)
    log_sig_abs = jnp.log(0.5 * (jnp.abs(th) + 1.0))   # log(sigmoid(|x|))
    s = 0.5 * (th + 1.0)                      # sigmoid(x)

    # BCEWithLogits: max(x,0) - x*t + log1p(exp(-|x|)) = max(x,0) - x*t - log(sigmoid(|x|))
    bce = jnp.maximum(x, 0.0) - x * t - log_sig_abs
    pt = s * t                                # intersection terms
    un = s + t - pt                           # union terms

    def _acc(ref, v):                         # (C, TH, TW) -> (1, 1, TW)
        ref[...] += jnp.sum(jnp.sum(v, axis=0), axis=0, keepdims=True)[None]

    # Per-(b, lane) partials accumulate in the resident output blocks; the
    # cheap cross-lane / scalar combine happens once, outside the kernel.
    _acc(bce_ref, bce)
    _acc(inter_ref, pt)
    _acc(union_ref, un)


def _pick_w_tile(w2, cap=2048):
    """Lane tile: a multiple of 128 dividing w2 (>= 2 tiles when w2 >= 256),
    so v7x's two TensorCores get work even at batch 1."""
    if w2 % 128 != 0 or w2 < 256:
        return w2
    limit = min(cap, w2 // 2)
    tw = (limit // 128) * 128
    while tw >= 128:
        if w2 % tw == 0:
            return tw
        tw -= 128
    return w2


def _pick_h_tile(h_rows, c, tw, out_isz, tgt_isz):
    """Rows per grid step: multiple of 32 (covers f32/bf16/int8 sublane packing)
    or the full extent, sized so 2x double-buffered input blocks plus the live
    f32 temporaries stay inside the VMEM working-set budget."""
    per_row_in = (c * out_isz + tgt_isz) * tw
    per_row_f32 = c * tw * 4
    per_row_budget = 2 * per_row_in + 10 * per_row_f32
    cap = _VMEM_WORKSET_BUDGET // max(per_row_budget, 1)
    cap = min(cap, _MAX_IN_BLOCK_BYTES // max(per_row_in, 1))
    if cap >= h_rows:
        return h_rows
    mult = 32 if cap >= 32 else 8
    return max(8, (cap // mult) * mult)


def _vmem_limit(c, th, tw, out_isz, tgt_isz):
    in_blocks = 2 * (c * out_isz + tgt_isz) * th * tw    # double-buffered inputs
    f32_temps = 10 * c * th * tw * 4                     # live f32 intermediates
    est = in_blocks + f32_temps + (2 << 20)
    return int(min(48 << 20, max(32 << 20, est)))        # <= v7x 64 MiB physical


def combined_loss(outputs, targets, alpha=ALPHA):
    """outputs: [B, C, H, W] logits; targets: [B, H, W] in {0, 1}."""
    B, C, H, W = outputs.shape
    assert targets.shape == (B, H, W)
    out_isz = jnp.dtype(outputs.dtype).itemsize
    tgt_isz = jnp.dtype(targets.dtype).itemsize

    # ---- lane-density folding: pack g rows of H into the lane dim when W < 128
    g = max(1, 128 // W) if W < 128 else 1
    W2 = g * W

    # ---- tile sizes
    TW = _pick_w_tile(W2)
    n_w = W2 // TW
    h_min = -(-H // g)                                   # folded rows (ceil)
    TH = _pick_h_tile(h_min, C, TW, out_isz, tgt_isz)
    if TH >= h_min:
        TH = h_min
        H2 = h_min
    else:
        H2 = TH * (-(-h_min // TH))
    n_h = H2 // TH

    # ---- single neutral pad along H (huge negative logit -> sigmoid == 0 and
    #      log(sigmoid(|x|)) == 0 exactly; zero target -> zero contribution to
    #      the BCE sum, the intersection and the union).
    Hp = g * H2
    if Hp != H:
        pad = Hp - H
        outputs = jnp.pad(outputs, ((0, 0), (0, 0), (0, pad), (0, 0)),
                          constant_values=_PAD_LOGIT)
        targets = jnp.pad(targets, ((0, 0), (0, pad), (0, 0)),
                          constant_values=0)
    outputs_f = outputs.reshape(B, C, H2, W2)            # contiguous reshape
    targets_f = targets.reshape(B, H2, W2)

    part_shape = jax.ShapeDtypeStruct((B, 1, W2), jnp.float32)
    part_spec = pl.BlockSpec((1, 1, TW), lambda b, w, k: (b, 0, w))

    n_kernel_elems = B * C * H2 * W2
    cost = pl.CostEstimate(
        flops=int(12 * n_kernel_elems),
        transcendentals=int(2 * n_kernel_elems),
        bytes_accessed=int(n_kernel_elems * out_isz
                           + B * H2 * W2 * tgt_isz
                           + 3 * B * W2 * 4),
    )

    bce_part, inter_part, union_part = pl.pallas_call(
        _combined_loss_kernel,
        out_shape=(part_shape, part_shape, part_shape),
        grid_spec=pltpu.PrefetchScalarGridSpec(
            num_scalar_prefetch=0,
            grid=(B, n_w, n_h),
            in_specs=[
                pl.BlockSpec((1, C, TH, TW), lambda b, w, k: (b, 0, k, w)),
                pl.BlockSpec((1, TH, TW), lambda b, w, k: (b, k, w)),
            ],
            out_specs=(part_spec, part_spec, part_spec),
        ),
        compiler_params=pltpu.CompilerParams(
            dimension_semantics=("parallel", "parallel", "arbitrary"),
            vmem_limit_bytes=_vmem_limit(C, TH, TW, out_isz, tgt_isz),
        ),
        cost_estimate=cost,
    )(outputs_f, targets_f)

    # ---- tiny final combine in plain JAX (exactly the PyTorch semantics) ----
    ce_loss = jnp.sum(bce_part) / float(B * C * H * W)   # padded rows add 0
    inter = jnp.sum(inter_part.reshape(B, g, W), axis=1)   # per-(b, w)
    union = jnp.sum(union_part.reshape(B, g, W), axis=1)   # per-(b, w)
    iou = (inter + EPS) / (union + EPS)
    mean_iou = jnp.mean(iou)
    iou_loss = 1.0 - mean_iou
    lambda_iou = 1.0 - mean_iou                           # matches the module
    return alpha * ce_loss + (1.0 - alpha) * lambda_iou * iou_loss


def _reference_loss(outputs, targets, alpha=ALPHA):
    """Pure-JAX reference matching the PyTorch semantics exactly
    (IoU sums over dims (1, 2) = (C, H), i.e. per-(b, w))."""
    x = outputs.astype(jnp.float32)
    t4 = targets[:, None, :, :].astype(jnp.float32)
    ce = jnp.mean(jnp.maximum(x, 0.0) - x * t4 + jnp.log1p(jnp.exp(-jnp.abs(x))))
    p = jax.nn.sigmoid(x)
    inter = jnp.sum(p * t4, axis=(1, 2))                  # (B, W)
    union = jnp.sum(p + t4 - p * t4, axis=(1, 2))         # (B, W)
    iou = (inter + EPS) / (union + EPS)
    m = jnp.mean(iou)
    return alpha * ce + (1.0 - alpha) * (1.0 - m) * (1.0 - m)


if __name__ == "__main__":
    key = jax.random.PRNGKey(0)
    k1, k2, k3, k4 = jax.random.split(key, 4)

    # Case 1: the module's natural shape (binary segmentation, C == 1), f32.
    B, C, H, W = 2, 1, 16, 16
    logits = jax.random.normal(k1, (B, C, H, W), dtype=jnp.float32)
    labels = (jax.random.uniform(k2, (B, H, W)) > 0.5).astype(jnp.float32)
    got = jax.block_until_ready(combined_loss(logits, labels))
    want = jax.block_until_ready(_reference_loss(logits, labels))
    assert jnp.allclose(got, want, rtol=1e-4, atol=1e-5), (got, want)

    # Case 2: odd H / narrow W / bf16 logits -> exercises padding + lane folding.
    Bb, Cb, Hb, Wb = 2, 1, 37, 24
    logits2 = jax.random.normal(k3, (Bb, Cb, Hb, Wb), dtype=jnp.bfloat16)
    labels2 = (jax.random.uniform(k4, (Bb, Hb, Wb)) > 0.5).astype(jnp.float32)
    got2 = jax.block_until_ready(combined_loss(logits2, labels2))
    want2 = jax.block_until_ready(_reference_loss(logits2, labels2))
    assert jnp.allclose(got2, want2, rtol=1e-4, atol=1e-4), (got2, want2)

    print("KERNEL_OK")
</pallas_src>

<mosaic_0001>
module attributes {stable_mosaic.version = 11 : i64} {
  func.func @_combined_loss_kernel(%arg0: i32, %arg1: i32, %arg2: i32, %arg3: memref<1x1x2x128xf32, #tpu.memory_space<vmem>>, %arg4: memref<1x2x128xf32, #tpu.memory_space<vmem>>, %arg5: memref<1x1x128xf32, #tpu.memory_space<vmem>>, %arg6: memref<1x1x128xf32, #tpu.memory_space<vmem>>, %arg7: memref<1x1x128xf32, #tpu.memory_space<vmem>>) attributes {dimension_semantics = [#tpu.dimension_semantics<parallel>, #tpu.dimension_semantics<parallel>, #tpu.dimension_semantics<arbitrary>], iteration_bounds = array<i64: 2, 1, 1>, scalar_prefetch = 0 : i64, scratch_operands = 0 : i64, tpu.core_type = #tpu.core_type<tc>, window_params = [{transform_indices = @transform_0, window_bounds = array<i64: 1, 1, 2, 128>}, {transform_indices = @transform_1, window_bounds = array<i64: 1, 2, 128>}, {transform_indices = @transform_2, window_bounds = array<i64: 1, 1, 128>}, {transform_indices = @transform_3, window_bounds = array<i64: 1, 1, 128>}, {transform_indices = @transform_4, window_bounds = array<i64: 1, 1, 128>}]} {
    %c0_i32 = arith.constant 0 : i32
    %0 = arith.cmpi eq, %arg2, %c0_i32 : i32
    %1 = arith.extui %0 : i1 to i32
    %c0_i32_0 = arith.constant 0 : i32
    %2 = arith.cmpi ne, %1, %c0_i32_0 : i32
    scf.if %2 {
      %cst_36 = arith.constant 0.000000e+00 : f32
      %48 = vector.broadcast %cst_36 : f32 to vector<1x1x128xf32>
      %c0_37 = arith.constant 0 : index
      %c0_38 = arith.constant 0 : index
      %c0_39 = arith.constant 0 : index
      %49 = vector.load %arg5[%c0_37, %c0_38, %c0_39] : memref<1x1x128xf32, #tpu.memory_space<vmem>>, vector<1x1x128xf32>
      tpu.vector_store %arg5[%c0_37, %c0_38, %c0_39], %48 {strides = array<i32>} : memref<1x1x128xf32, #tpu.memory_space<vmem>>, vector<1x1x128xf32>,
      %cst_40 = arith.constant 0.000000e+00 : f32
      %50 = vector.broadcast %cst_40 : f32 to vector<1x1x128xf32>
      %c0_41 = arith.constant 0 : index
      %c0_42 = arith.constant 0 : index
      %c0_43 = arith.constant 0 : index
      %51 = vector.load %arg6[%c0_41, %c0_42, %c0_43] : memref<1x1x128xf32, #tpu.memory_space<vmem>>, vector<1x1x128xf32>
      tpu.vector_store %arg6[%c0_41, %c0_42, %c0_43], %50 {strides = array<i32>} : memref<1x1x128xf32, #tpu.memory_space<vmem>>, vector<1x1x128xf32>,
      %cst_44 = arith.constant 0.000000e+00 : f32
      %52 = vector.broadcast %cst_44 : f32 to vector<1x1x128xf32>
      %c0_45 = arith.constant 0 : index
      %c0_46 = arith.constant 0 : index
      %c0_47 = arith.constant 0 : index
      %53 = vector.load %arg7[%c0_45, %c0_46, %c0_47] : memref<1x1x128xf32, #tpu.memory_space<vmem>>, vector<1x1x128xf32>
      tpu.vector_store %arg7[%c0_45, %c0_46, %c0_47], %52 {strides = array<i32>} : memref<1x1x128xf32, #tpu.memory_space<vmem>>, vector<1x1x128xf32>,
    } else {
    }
    %c0 = arith.constant 0 : index
    %c0_1 = arith.constant 0 : index
    %c0_2 = arith.constant 0 : index
    %c0_3 = arith.constant 0 : index
    %3 = vector.load %arg3[%c0, %c0_1, %c0_2, %c0_3] : memref<1x1x2x128xf32, #tpu.memory_space<vmem>>, vector<1x1x2x128xf32>
    %4 = vector.shape_cast %3 : vector<1x1x2x128xf32> to vector<1x2x128xf32>
    %c0_4 = arith.constant 0 : index
    %c0_5 = arith.constant 0 : index
    %c0_6 = arith.constant 0 : index
    %5 = vector.load %arg4[%c0_4, %c0_5, %c0_6] : memref<1x2x128xf32, #tpu.memory_space<vmem>>, vector<1x2x128xf32>
    %cst = arith.constant 5.000000e-01 : f32
    %6 = vector.broadcast %cst : f32 to vector<1x2x128xf32>
    %7 = arith.mulf %6, %4 : vector<1x2x128xf32>
    %8 = math.tanh %7 : vector<1x2x128xf32>
    %9 = math.absf %8 : vector<1x2x128xf32>
    %cst_7 = arith.constant 1.000000e+00 : f32
    %10 = vector.broadcast %cst_7 : f32 to vector<1x2x128xf32>
    %11 = arith.addf %9, %10 : vector<1x2x128xf32>
    %cst_8 = arith.constant 5.000000e-01 : f32
    %12 = vector.broadcast %cst_8 : f32 to vector<1x2x128xf32>
    %13 = arith.mulf %12, %11 : vector<1x2x128xf32>
    %14 = math.log %13 : vector<1x2x128xf32>
    %cst_9 = arith.constant 1.000000e+00 : f32
    %15 = vector.broadcast %cst_9 : f32 to vector<1x2x128xf32>
    %16 = arith.addf %8, %15 : vector<1x2x128xf32>
    %cst_10 = arith.constant 5.000000e-01 : f32
    %17 = vector.broadcast %cst_10 : f32 to vector<1x2x128xf32>
    %18 = arith.mulf %17, %16 : vector<1x2x128xf32>
    %cst_11 = arith.constant 0.000000e+00 : f32
    %19 = vector.broadcast %cst_11 : f32 to vector<1x2x128xf32>
    %20 = arith.maximumf %4, %19 : vector<1x2x128xf32>
    %21 = arith.mulf %4, %5 : vector<1x2x128xf32>
    %22 = arith.subf %20, %21 : vector<1x2x128xf32>
    %23 = arith.subf %22, %14 : vector<1x2x128xf32>
    %24 = arith.mulf %18, %5 : vector<1x2x128xf32>
    %25 = arith.addf %18, %5 : vector<1x2x128xf32>
    %26 = arith.subf %25, %24 : vector<1x2x128xf32>
    %c0_12 = arith.constant 0 : index
    %c0_13 = arith.constant 0 : index
    %c0_14 = arith.constant 0 : index
    %27 = vector.load %arg5[%c0_12, %c0_13, %c0_14] : memref<1x1x128xf32, #tpu.memory_space<vmem>>, vector<1x1x128xf32>
    %cst_15 = arith.constant dense<0.000000e+00> : vector<2x128xf32>
    %28 = vector.multi_reduction <add>, %23, %cst_15 [0] : vector<1x2x128xf32> to vector<2x128xf32>
    %cst_16 = arith.constant dense<0.000000e+00> : vector<128xf32>
    %29 = vector.multi_reduction <add>, %28, %cst_16 [0] : vector<2x128xf32> to vector<128xf32>
    %30 = vector.shape_cast %29 : vector<128xf32> to vector<1x128xf32>
    %31 = vector.shape_cast %30 : vector<1x128xf32> to vector<1x1x128xf32>
    %32 = arith.addf %27, %31 : vector<1x1x128xf32>
    %c0_17 = arith.constant 0 : index
    %c0_18 = arith.constant 0 : index
    %c0_19 = arith.constant 0 : index
    %33 = vector.load %arg5[%c0_17, %c0_18, %c0_19] : memref<1x1x128xf32, #tpu.memory_space<vmem>>, vector<1x1x128xf32>
    tpu.vector_store %arg5[%c0_17, %c0_18, %c0_19], %32 {strides = array<i32>} : memref<1x1x128xf32, #tpu.memory_space<vmem>>, vector<1x1x128xf32>,
    %c0_20 = arith.constant 0 : index
    %c0_21 = arith.constant 0 : index
    %c0_22 = arith.constant 0 : index
    %34 = vector.load %arg6[%c0_20, %c0_21, %c0_22] : memref<1x1x128xf32, #tpu.memory_space<vmem>>, vector<1x1x128xf32>
    %cst_23 = arith.constant dense<0.000000e+00> : vector<2x128xf32>
    %35 = vector.multi_reduction <add>, %24, %cst_23 [0] : vector<1x2x128xf32> to vector<2x128xf32>
    %cst_24 = arith.constant dense<0.000000e+00> : vector<128xf32>
    %36 = vector.multi_reduction <add>, %35, %cst_24 [0] : vector<2x128xf32> to vector<128xf32>
    %37 = vector.shape_cast %36 : vector<128xf32> to vector<1x128xf32>
    %38 = vector.shape_cast %37 : vector<1x128xf32> to vector<1x1x128xf32>
    %39 = arith.addf %34, %38 : vector<1x1x128xf32>
    %c0_25 = arith.constant 0 : index
    %c0_26 = arith.constant 0 : index
    %c0_27 = arith.constant 0 : index
    %40 = vector.load %arg6[%c0_25, %c0_26, %c0_27] : memref<1x1x128xf32, #tpu.memory_space<vmem>>, vector<1x1x128xf32>
    tpu.vector_store %arg6[%c0_25, %c0_26, %c0_27], %39 {strides = array<i32>} : memref<1x1x128xf32, #tpu.memory_space<vmem>>, vector<1x1x128xf32>,
    %c0_28 = arith.constant 0 : index
    %c0_29 = arith.constant 0 : index
    %c0_30 = arith.constant 0 : index
    %41 = vector.load %arg7[%c0_28, %c0_29, %c0_30] : memref<1x1x128xf32, #tpu.memory_space<vmem>>, vector<1x1x128xf32>
    %cst_31 = arith.constant dense<0.000000e+00> : vector<2x128xf32>
    %42 = vector.multi_reduction <add>, %26, %cst_31 [0] : vector<1x2x128xf32> to vector<2x128xf32>
    %cst_32 = arith.constant dense<0.000000e+00> : vector<128xf32>
    %43 = vector.multi_reduction <add>, %42, %cst_32 [0] : vector<2x128xf32> to vector<128xf32>
    %44 = vector.shape_cast %43 : vector<128xf32> to vector<1x128xf32>
    %45 = vector.shape_cast %44 : vector<1x128xf32> to vector<1x1x128xf32>
    %46 = arith.addf %41, %45 : vector<1x1x128xf32>
    %c0_33 = arith.constant 0 : index
    %c0_34 = arith.constant 0 : index
    %c0_35 = arith.constant 0 : index
    %47 = vector.load %arg7[%c0_33, %c0_34, %c0_35] : memref<1x1x128xf32, #tpu.memory_space<vmem>>, vector<1x1x128xf32>
    tpu.vector_store %arg7[%c0_33, %c0_34, %c0_35], %46 {strides = array<i32>} : memref<1x1x128xf32, #tpu.memory_space<vmem>>, vector<1x1x128xf32>,
    return
  }
  func.func @transform_0(%arg0: i32, %arg1: i32, %arg2: i32) -> (i32, i32, i32, i32) {
    %c0_i32 = arith.constant 0 : i32
    %c0_i32_0 = arith.constant 0 : i32
    return %arg0, %c0_i32, %arg2, %arg1 : i32, i32, i32, i32
  }
  func.func @transform_1(%arg0: i32, %arg1: i32, %arg2: i32) -> (i32, i32, i32) {
    %c0_i32 = arith.constant 0 : i32
    return %arg0, %arg2, %arg1 : i32, i32, i32
  }
  func.func @transform_2(%arg0: i32, %arg1: i32, %arg2: i32) -> (i32, i32, i32) {
    %c0_i32 = arith.constant 0 : i32
    %c0_i32_0 = arith.constant 0 : i32
    return %arg0, %c0_i32, %arg1 : i32, i32, i32
  }
  func.func @transform_3(%arg0: i32, %arg1: i32, %arg2: i32) -> (i32, i32, i32) {
    %c0_i32 = arith.constant 0 : i32
    %c0_i32_0 = arith.constant 0 : i32
    return %arg0, %c0_i32, %arg1 : i32, i32, i32
  }
  func.func @transform_4(%arg0: i32, %arg1: i32, %arg2: i32) -> (i32, i32, i32) {
    %c0_i32 = arith.constant 0 : i32
    %c0_i32_0 = arith.constant 0 : i32
    return %arg0, %c0_i32, %arg1 : i32, i32, i32
  }
}

</mosaic_0001>

<llo_original>
// kernel: tpu_custom_call.1
$region0: #{tpu_custom_call.1}
  #allocation0 [shape = 'u32[]', space=smem, size = 0x4, offset = 0x4, fixed_abs, tag = 'smem constant byte address 0x4 - core index']
  #allocation1 [shape = 'u32[144,128]{1,0:T(1,128)}', space=vmem, size = 0x12000, scoped, tag = 'internal scratch']
  %s0 = inlined_call_operand.hbm [shape: f32[2,1,2,128], index: 0, kind: input, shape index: {}]
  %s1 = inlined_call_operand.hbm [shape: f32[2,2,128], index: 1, kind: input, shape index: {}]
  %s2 = inlined_call_operand.hbm [shape: f32[2,1,128], index: 2, kind: output, shape index: {0}]
  %s3 = inlined_call_operand.hbm [shape: f32[2,1,128], index: 3, kind: output, shape index: {1}]
  %s4 = inlined_call_operand.hbm [shape: f32[2,1,128], index: 4, kind: output, shape index: {2}]
  %5 = xla_tuple %s2, %s3, %s4
  %s6 = sld [smem:[#allocation0]]
  $region69: #{tpu_custom_call.1} parent=0
    _
  %s8 = ssub.s32 1, %s6
  %s9 = scalar_select 0, %s8, %s6
  $region1: #{tpu_custom_call.1} parent=0
    #allocation2 [shape = 'u8[2048]{0}', space=vmem, size = 0x800, scoped, tag = 'input window, operand 0']
    #allocation3 [shape = 's32[2]{0}', space=sflag, size = 0x8, scoped, tag = 'scoped memory for tpu_custom_call.1']
    #allocation4 [shape = 's32[2]{0}', space=sflag, size = 0x8, scoped, tag = 'scoped memory for tpu_custom_call.1']
    #allocation5 [shape = 'u8[2048]{0}', space=vmem, size = 0x800, scoped, tag = 'input window, operand 1']
    #allocation6 [shape = 's32[2]{0}', space=sflag, size = 0x8, scoped, tag = 'scoped memory for tpu_custom_call.1']
    #allocation7 [shape = 'u8[1024]{0}', space=vmem, size = 0x400, scoped, tag = 'output window, operand 0']
    #allocation8 [shape = 'u8[1024]{0}', space=vmem, size = 0x400, scoped, tag = 'output window, operand 1']
    #allocation9 [shape = 's32[2]{0}', space=sflag, size = 0x8, scoped, tag = 'scoped memory for tpu_custom_call.1']
    #allocation10 [shape = 'u8[1024]{0}', space=vmem, size = 0x400, scoped, tag = 'output window, operand 2']
    %10 = vsyncpa [#allocation3], 0
    %s11 = scalar_lea.sflag [#allocation3], 1
    %12 = vsyncpa %s11, 0
    %13 = vsyncpa [#allocation6], 0
    %s14 = scalar_lea.sflag [#allocation6], 1
    %15 = vsyncpa %s14, 0
    %16 = vsyncpa [#allocation4], 0
    %s17 = scalar_lea.sflag [#allocation4], 1
    %18 = vsyncpa %s17, 0
    %19 = vsyncpa [#allocation9], 0
    %s20 = scalar_lea.sflag [#allocation9], 1
    %21 = vsyncpa %s20, 0
    loop: start=0, step=1, limit=4
    $region2: #{tpu_custom_call.1} parent=1 // loop_pre_header
      _
    $region3: #{tpu_custom_call.1} parent=1 // loop_header
      %s23 = sphi 0, %s27
      %p24 = scmp.ge.s32.totalorder %s23, 4
      %s30 = sphi 0, %s49
      %s31 = sphi 0, %s45
      %s32 = sphi 0, %s41
      %s33 = sphi 0, %s30
      %s34 = sphi 0, %s31
      %s35 = sphi 0, %s32
      %s36 = sphi 0, %s33
      %s37 = sphi 0, %s34
      %s38 = sphi 0, %s35
      %s56 = sphi 0, %s58
      %s59 = sphi 0, %s56
      %s60 = sphi 0, %s59
      %s76 = sphi 0, %s60
      %s86 = sphi 0, %s88
      %s89 = sphi 0, %s86
      %s90 = sphi 0, %s89
      %s106 = sphi 0, %s90
      %s114 = sphi 0, %s116
      %s117 = sphi 0, %s114
      %s118 = sphi 0, %s117
      %s134 = sphi 0, %s118
      %s142 = sphi 0, %s144
      %s145 = sphi 0, %s142
      %s146 = sphi 0, %s145
      %s162 = sphi 0, %s146
      %s170 = sphi 0, %s172
      %s173 = sphi 0, %s170
      %s174 = sphi 0, %s173
      %s190 = sphi 0, %s174
    $region4: #{tpu_custom_call.1} parent=1 // loop_header_branch
      %26 = sbr.rel (%p24) target = $region8
    $region5: #{tpu_custom_call.1} parent=1 // loop_body
      %s28 = ssub.s32 %s23, 1
      %s29 = ssub.s32 %s23, 2
      %s39 = sadd.s32 1, %s32
      %p40 = scmp.ge.s32.totalorder %s39, 1
      %s41 = scalar_select %p40, 0, %s39
      %s42 = sadd.s32 1, %s31
      %s43 = scalar_select %p40, %s42, %s31
      %p44 = scmp.ge.s32.totalorder %s43, 1
      %s45 = scalar_select %p44, 0, %s43
      %s46 = sadd.s32 1, %s30
      %s47 = scalar_select %p44, %s46, %s30
      %p48 = scmp.ge.s32.totalorder %s47, 2
      %s49 = scalar_select %p48, 0, %s47
      %s50 = ssub.s32 %s30, %s49
      %s51 = ssub.s32 %s32, %s41
      %s52 = sor.u32 %s50, %s51
      %s53 = ssub.s32 %s31, %s45
      %s54 = sor.u32 %s52, %s53
      %p55 = scmp.eq.s32.totalorder %s54, 0
      %s57 = sadd.s32 %s56, 1
      %s58 = scalar_select %p55, %s56, %s57
      %p61 = pneg %p55
      %p62 = scmp.eq.s32.totalorder %s23, 1
      %p63 = por %p61, %p62
      %p64 = scmp.ne.s32.totalorder %s56, %s59
      %p65 = scmp.eq.s32.totalorder %s23, 0
      %p66 = por %p64, %p65
      %p67 = scmp.ne.s32.totalorder %s56, %s59
      %p68 = scmp.eq.s32.totalorder %s28, 1
      %p69 = por %p67, %p68
      %p70 = scmp.ne.s32.totalorder %s59, %s60
      %p71 = scmp.eq.s32.totalorder %s28, 0
      %p72 = por %p70, %p71
      %p73 = scmp.ne.s32.totalorder %s59, %s60
      %p74 = scmp.eq.s32.totalorder %s29, 1
      %p75 = por %p73, %p74
      %p77 = scmp.ne.s32.totalorder %s60, %s76
      %p78 = scmp.eq.s32.totalorder %s29, 0
      %p79 = por %p77, %p78
      %s80 = ssub.s32 %s30, %s49
      %s81 = ssub.s32 %s32, %s41
      %s82 = sor.u32 %s80, %s81
      %s83 = ssub.s32 %s31, %s45
      %s84 = sor.u32 %s82, %s83
      %p85 = scmp.eq.s32.totalorder %s84, 0
      %s87 = sadd.s32 %s86, 1
      %s88 = scalar_select %p85, %s86, %s87
      %p91 = pneg %p85
      %p92 = scmp.eq.s32.totalorder %s23, 1
      %p93 = por %p91, %p92
      %p94 = scmp.ne.s32.totalorder %s86, %s89
      %p95 = scmp.eq.s32.totalorder %s23, 0
      %p96 = por %p94, %p95
      %p97 = scmp.ne.s32.totalorder %s86, %s89
      %p98 = scmp.eq.s32.totalorder %s28, 1
      %p99 = por %p97, %p98
      %p100 = scmp.ne.s32.totalorder %s89, %s90
      %p101 = scmp.eq.s32.totalorder %s28, 0
      %p102 = por %p100, %p101
      %p103 = scmp.ne.s32.totalorder %s89, %s90
      %p104 = scmp.eq.s32.totalorder %s29, 1
      %p105 = por %p103, %p104
      %p107 = scmp.ne.s32.totalorder %s90, %s106
      %p108 = scmp.eq.s32.totalorder %s29, 0
      %p109 = por %p107, %p108
      %s110 = ssub.s32 %s30, %s49
      %s111 = ssub.s32 %s31, %s45
      %s112 = sor.u32 %s110, %s111
      %p113 = scmp.eq.s32.totalorder %s112, 0
      %s115 = sadd.s32 %s114, 1
      %s116 = scalar_select %p113, %s114, %s115
      %p119 = pneg %p113
      %p120 = scmp.eq.s32.totalorder %s23, 1
      %p121 = por %p119, %p120
      %p122 = scmp.ne.s32.totalorder %s114, %s117
      %p123 = scmp.eq.s32.totalorder %s23, 0
      %p124 = por %p122, %p123
      %p125 = scmp.ne.s32.totalorder %s114, %s117
      %p126 = scmp.eq.s32.totalorder %s28, 1
      %p127 = por %p125, %p126
      %p128 = scmp.ne.s32.totalorder %s117, %s118
      %p129 = scmp.eq.s32.totalorder %s28, 0
      %p130 = por %p128, %p129
      %p131 = scmp.ne.s32.totalorder %s117, %s118
      %p132 = scmp.eq.s32.totalorder %s29, 1
      %p133 = por %p131, %p132
      %p135 = scmp.ne.s32.totalorder %s118, %s134
      %p136 = scmp.eq.s32.totalorder %s29, 0
      %p137 = por %p135, %p136
      %s138 = ssub.s32 %s30, %s49
      %s139 = ssub.s32 %s31, %s45
      %s140 = sor.u32 %s138, %s139
      %p141 = scmp.eq.s32.totalorder %s140, 0
      %s143 = sadd.s32 %s142, 1
      %s144 = scalar_select %p141, %s142, %s143
      %p147 = pneg %p141
      %p148 = scmp.eq.s32.totalorder %s23, 1
      %p149 = por %p147, %p148
      %p150 = scmp.ne.s32.totalorder %s142, %s145
      %p151 = scmp.eq.s32.totalorder %s23, 0
      %p152 = por %p150, %p151
      %p153 = scmp.ne.s32.totalorder %s142, %s145
      %p154 = scmp.eq.s32.totalorder %s28, 1
      %p155 = por %p153, %p154
      %p156 = scmp.ne.s32.totalorder %s145, %s146
      %p157 = scmp.eq.s32.totalorder %s28, 0
      %p158 = por %p156, %p157
      %p159 = scmp.ne.s32.totalorder %s145, %s146
      %p160 = scmp.eq.s32.totalorder %s29, 1
      %p161 = por %p159, %p160
      %p163 = scmp.ne.s32.totalorder %s146, %s162
      %p164 = scmp.eq.s32.totalorder %s29, 0
      %p165 = por %p163, %p164
      %s166 = ssub.s32 %s30, %s49
      %s167 = ssub.s32 %s31, %s45
      %s168 = sor.u32 %s166, %s167
      %p169 = scmp.eq.s32.totalorder %s168, 0
      %s171 = sadd.s32 %s170, 1
      %s172 = scalar_select %p169, %s170, %s171
      %p175 = pneg %p169
      %p176 = scmp.eq.s32.totalorder %s23, 1
      %p177 = por %p175, %p176
      %p178 = scmp.ne.s32.totalorder %s170, %s173
      %p179 = scmp.eq.s32.totalorder %s23, 0
      %p180 = por %p178, %p179
      %p181 = scmp.ne.s32.totalorder %s170, %s173
      %p182 = scmp.eq.s32.totalorder %s28, 1
      %p183 = por %p181, %p182
      %p184 = scmp.ne.s32.totalorder %s173, %s174
      %p185 = scmp.eq.s32.totalorder %s28, 0
      %p186 = por %p184, %p185
      %p187 = scmp.ne.s32.totalorder %s173, %s174
      %p188 = scmp.eq.s32.totalorder %s29, 1
      %p189 = por %p187, %p188
      %p191 = scmp.ne.s32.totalorder %s174, %s190
      %p192 = scmp.eq.s32.totalorder %s29, 0
      %p193 = por %p191, %p192
      %p194 = scmp.le.s32.totalorder 1, %s23
      %p195 = scmp.lt.s32.totalorder %s23, 3
      %p196 = pnand %p194, %p195
      %p197 = pneg %p196
      // Predicated region
      $region9: #{tpu_custom_call.1} parent=5 // pred_check
        _
      $region10: #{tpu_custom_call.1} parent=5 // pred_check_branch
        %199 = sbr.rel (%p196) target = $region12
      $region11: #{tpu_custom_call.1} parent=5 // pred_region
        %s200 = ssub.s32 %s23, 1
      $region12: #{tpu_custom_call.1} parent=5 // pred_fallthru
        _
      %p201 = scmp.lt.s32.totalorder %s23, 2
      // Predicated region
      $region13: #{tpu_custom_call.1} parent=5 // pred_check
        %p202 = pneg %p201
      $region14: #{tpu_custom_call.1} parent=5 // pred_check_branch
        %204 = sbr.rel (%p202) target = $region16
      $region15: #{tpu_custom_call.1} parent=5 // pred_region
        // Predicated region
        $region17: #{tpu_custom_call.1} parent=15 // pred_check
          %p205 = pneg %p66
        $region18: #{tpu_custom_call.1} parent=15 // pred_check_branch
          %207 = sbr.rel (%p205) target = $region20
        $region19: #{tpu_custom_call.1} parent=15 // pred_region
          %s208 = sand.u32 %s56, 1
          %s209 = scalar_lea.sflag [#allocation3], %s208
          %s210 = sand.u32 %s56, 1
          %s211 = smul.addr %s210, 2
          %s212 = scalar_lea.vmem [#allocation2], %s211
          %s214 = ssub.s32 32, 32
          %215 = vsyncadd %s209, %s214
          %s216 = sadd.s32 %s31, %s32
          %s217 = sadd.s32 %s216, %s30
          %s218 = smul.addr %s217, 32
          %s219 = scalar_lea.hbm %s0, %s218
          %s221 = sshll.u32 %s212, 4
          %s222 = int_to_ptr.vmem [resolvable:$true] %s221
          %224 = dma.hbm_to_vmem [thread:$0]  %s219, 32, %s222, %s209
        $region20: #{tpu_custom_call.1} parent=15 // pred_fallthru
          _
        // Predicated region
        $region21: #{tpu_custom_call.1} parent=15 // pred_check
          %p225 = pneg %p96
        $region22: #{tpu_custom_call.1} parent=15 // pred_check_branch
          %227 = sbr.rel (%p225) target = $region24
        $region23: #{tpu_custom_call.1} parent=15 // pred_region
          %s228 = sand.u32 %s86, 1
          %s229 = scalar_lea.sflag [#allocation6], %s228
          %s230 = sand.u32 %s86, 1
          %s231 = smul.addr %s230, 2
          %s232 = scalar_lea.vmem [#allocation5], %s231
          %s234 = ssub.s32 32, 32
          %235 = vsyncadd %s229, %s234
          %s236 = sadd.s32 %s31, %s32
          %s237 = sadd.s32 %s236, %s30
          %s238 = smul.addr %s237, 32
          %s239 = scalar_lea.hbm %s1, %s238
          %s241 = sshll.u32 %s232, 4
          %s242 = int_to_ptr.vmem [resolvable:$true] %s241
          %244 = dma.hbm_to_vmem [thread:$0]  %s239, 32, %s242, %s229
        $region24: #{tpu_custom_call.1} parent=15 // pred_fallthru
          _
      $region16: #{tpu_custom_call.1} parent=5 // pred_fallthru
        _
      %p245 = scmp.le.s32.totalorder 1, %s23
      %p246 = scmp.lt.s32.totalorder %s23, 3
      %p247 = pnand %p245, %p246
      %p248 = pneg %p247
      // Predicated region
      $region25: #{tpu_custom_call.1} parent=5 // pred_check
        _
      $region26: #{tpu_custom_call.1} parent=5 // pred_check_branch
        %250 = sbr.rel (%p247) target = $region28
      $region27: #{tpu_custom_call.1} parent=5 // pred_region
        %s251 = ssub.s32 %s23, 1
        %s252 = sand.u32 %s59, 1
        %s253 = scalar_lea.sflag [#allocation3], %s252
        %s254 = sand.u32 %s59, 1
        %s255 = smul.addr %s254, 2
        %s256 = scalar_lea.vmem [#allocation2], %s255
        // Predicated region
        $region29: #{tpu_custom_call.1} parent=27 // pred_check
          %p257 = pneg %p72
        $region30: #{tpu_custom_call.1} parent=27 // pred_check_branch
          %259 = sbr.rel (%p257) target = $region32
        $region31: #{tpu_custom_call.1} parent=27 // pred_region
          %260 = dma.done %s253, 32
        $region32: #{tpu_custom_call.1} parent=27 // pred_fallthru
          _
        %s261 = sand.u32 %s89, 1
        %s262 = scalar_lea.sflag [#allocation6], %s261
        %s263 = sand.u32 %s89, 1
        %s264 = smul.addr %s263, 2
        %s265 = scalar_lea.vmem [#allocation5], %s264
        // Predicated region
        $region33: #{tpu_custom_call.1} parent=27 // pred_check
          %p266 = pneg %p102
        $region34: #{tpu_custom_call.1} parent=27 // pred_check_branch
          %268 = sbr.rel (%p266) target = $region36
        $region35: #{tpu_custom_call.1} parent=27 // pred_region
          %269 = dma.done %s262, 32
        $region36: #{tpu_custom_call.1} parent=27 // pred_fallthru
          _
        %s270 = sand.u32 %s59, 1
        %s271 = scalar_lea.sflag [#allocation3], %s270
        %s272 = sand.u32 %s59, 1
        %s273 = smul.addr %s272, 2
        %s274 = scalar_lea.vmem [#allocation2], %s273
        %p275 = pneg %p72
        %p276 = pneg %p69
        %s277 = sand.u32 %s89, 1
        %s278 = scalar_lea.sflag [#allocation6], %s277
        %s279 = sand.u32 %s89, 1
        %s280 = smul.addr %s279, 2
        %s281 = scalar_lea.vmem [#allocation5], %s280
        %p282 = pneg %p102
        %p283 = pneg %p99
        %p284 = pneg %p130
        %p285 = pneg %p127
        %s286 = sand.u32 %s117, 1
        %s287 = scalar_lea.sflag [#allocation4], %s286
        %s288 = sand.u32 %s117, 1
        %s289 = scalar_lea.vmem [#allocation7], %s288
        %p290 = pneg %p158
        %p291 = pneg %p155
        %s292 = sand.u32 %s28, 1
        %s293 = scalar_lea.sflag [#allocation9], %s292
        %s294 = sand.u32 %s145, 1
        %s295 = scalar_lea.vmem [#allocation8], %s294
        %p296 = pneg %p186
        %p297 = pneg %p183
        %s298 = sand.u32 %s28, 1
        %s299 = scalar_lea.sflag [#allocation9], %s298
        %s300 = sand.u32 %s173, 1
        %s301 = scalar_lea.vmem [#allocation10], %s300
        %p302 = scmp.eq.s32.totalorder %s35, 0
        // Predicated region
        $region37: #{tpu_custom_call.1} parent=27 // pred_check
          %p303 = pneg %p302
        $region38: #{tpu_custom_call.1} parent=27 // pred_check_branch
          %305 = sbr.rel (%p303) target = $region40
        $region39: #{tpu_custom_call.1} parent=27 // pred_region
          %306 = vst [vmem:[%s289] sm:$0x1] 0.0
          %307 = vst [vmem:[%s295] sm:$0x1] 0.0
          %308 = vst [vmem:[%s301] sm:$0x1] 0.0
        $region40: #{tpu_custom_call.1} parent=27 // pred_fallthru
          _
        %v309 = vld [vmem:[%s256] sm:$0x3]
        %v310 = vld [vmem:[%s265] sm:$0x3]
        %v311 = vmul.f32 %v309, 0.5
        %v312 = vtanh.pop %v311
        %v313 = vand.u32 2147483647, %v312
        %v314 = vadd.f32 %v313, 1.0
        %v315 = vmul.f32 %v314, 0.5
        %v316 = vlog2.pop %v315
        %v317 = vmul.f32 %v316, 0.6931472
        %v318 = vadd.f32 %v312, 1.0
        %v319 = vmul.f32 %v318, 0.5
        %v320 = vmax.f32 %v309, 0.0
        %v321 = vmul.f32 %v309, %v310
        %v322 = vsub.f32 %v320, %v321
        %v323 = vsub.f32 %v322, %v317
        %v324 = vmul.f32 %v319, %v310
        %v325 = vadd.f32 %v319, %v310
        %v326 = vsub.f32 %v325, %v324
        %v327 = vld [vmem:[%s289] sm:$0x1]
        %v328 = vadd.f32 %v323, 0.0
        %vm329 = vcmask 1041408
        %v330 = vsel %vm329, %v328, 0.0
        %v331 = vrot.slane %v330, 4
        %v332 = vadd.f32 %v330, %v331
        %v333 = vrot.slane %v332, 2
        %v334 = vadd.f32 %v332, %v333
        %v335 = vrot.slane %v334, 1
        %v336 = vadd.f32 %v334, %v335
        %v337 = vadd.f32 %v327, %v336
        %338 = vst [vmem:[%s289] sm:$0x1] %v337
        %v339 = vld [vmem:[%s295] sm:$0x1]
        %v340 = vadd.f32 %v324, 0.0
        %v341 = vsel %vm329, %v340, 0.0
        %v342 = vrot.slane %v341, 4
        %v343 = vadd.f32 %v341, %v342
        %v344 = vrot.slane %v343, 2
        %v345 = vadd.f32 %v343, %v344
        %v346 = vrot.slane %v345, 1
        %v347 = vadd.f32 %v345, %v346
        %v348 = vadd.f32 %v339, %v347
        %349 = vst [vmem:[%s295] sm:$0x1] %v348
        %v350 = vld [vmem:[%s301] sm:$0x1]
        %v351 = vadd.f32 %v326, 0.0
        %v352 = vsel %vm329, %v351, 0.0
        %v353 = vrot.slane %v352, 4
        %v354 = vadd.f32 %v352, %v353
        %v355 = vrot.slane %v354, 2
        %v356 = vadd.f32 %v354, %v355
        %v357 = vrot.slane %v356, 1
        %v358 = vadd.f32 %v356, %v357
        %v359 = vadd.f32 %v350, %v358
        %360 = vst [vmem:[%s301] sm:$0x1] %v359
        %s361 = sand.u32 %s117, 1
        %s362 = scalar_lea.sflag [#allocation4], %s361
        %s363 = sand.u32 %s117, 1
        %s364 = scalar_lea.vmem [#allocation7], %s363
        %s365 = sand.u32 %s28, 1
        %s366 = scalar_lea.sflag [#allocation9], %s365
        %s367 = sand.u32 %s145, 1
        %s368 = scalar_lea.vmem [#allocation8], %s367
        %s369 = sand.u32 %s28, 1
        %s370 = scalar_lea.sflag [#allocation9], %s369
        %s371 = sand.u32 %s173, 1
        %s372 = scalar_lea.vmem [#allocation10], %s371
        // Predicated region
        $region41: #{tpu_custom_call.1} parent=27 // pred_check
          %p373 = pneg %p127
        $region42: #{tpu_custom_call.1} parent=27 // pred_check_branch
          %375 = sbr.rel (%p373) target = $region44
        $region43: #{tpu_custom_call.1} parent=27 // pred_region
          %s377 = ssub.s32 16, 16
          %378 = vsyncadd %s362, %s377
          %s379 = sadd.s32 %s34, %s33
          %s380 = smul.addr %s379, 16
          %s381 = scalar_lea.hbm %s2, %s380
          %s383 = sshll.u32 %s364, 4
          %s384 = int_to_ptr.vmem [resolvable:$true] %s383
          %386 = dma.vmem_to_hbm [thread:$0]  %s384, 16, %s381, %s362
        $region44: #{tpu_custom_call.1} parent=27 // pred_fallthru
          _
        // Predicated region
        $region45: #{tpu_custom_call.1} parent=27 // pred_check
          %p387 = pneg %p155
        $region46: #{tpu_custom_call.1} parent=27 // pred_check_branch
          %389 = sbr.rel (%p387) target = $region48
        $region47: #{tpu_custom_call.1} parent=27 // pred_region
          %s391 = ssub.s32 16, 16
          %392 = vsyncadd %s366, %s391
          %s393 = sadd.s32 %s34, %s33
          %s394 = smul.addr %s393, 16
          %s395 = scalar_lea.hbm %s3, %s394
          %s397 = sshll.u32 %s368, 4
          %s398 = int_to_ptr.vmem [resolvable:$true] %s397
          %400 = dma.vmem_to_hbm [thread:$0]  %s398, 16, %s395, %s366
        $region48: #{tpu_custom_call.1} parent=27 // pred_fallthru
          _
        // Predicated region
        $region49: #{tpu_custom_call.1} parent=27 // pred_check
          %p401 = pneg %p183
        $region50: #{tpu_custom_call.1} parent=27 // pred_check_branch
          %403 = sbr.rel (%p401) target = $region52
        $region51: #{tpu_custom_call.1} parent=27 // pred_region
          %s405 = ssub.s32 16, 16
          %406 = vsyncadd %s370, %s405
          %s407 = sadd.s32 %s34, %s33
          %s408 = smul.addr %s407, 16
          %s409 = scalar_lea.hbm %s4, %s408
          %s411 = sshll.u32 %s372, 4
          %s412 = int_to_ptr.vmem [resolvable:$true] %s411
          %414 = dma.vmem_to_hbm [thread:$0]  %s412, 16, %s409, %s370
        $region52: #{tpu_custom_call.1} parent=27 // pred_fallthru
          _
      $region28: #{tpu_custom_call.1} parent=5 // pred_fallthru
        _
      %p415 = scmp.le.s32.totalorder 2, %s23
      // Predicated region
      $region53: #{tpu_custom_call.1} parent=5 // pred_check
        %p416 = pneg %p415
      $region54: #{tpu_custom_call.1} parent=5 // pred_check_branch
        %418 = sbr.rel (%p416) target = $region56
      $region55: #{tpu_custom_call.1} parent=5 // pred_region
        %s419 = ssub.s32 %s23, 2
        // Predicated region
        $region57: #{tpu_custom_call.1} parent=55 // pred_check
          %p420 = pneg %p133
        $region58: #{tpu_custom_call.1} parent=55 // pred_check_branch
          %422 = sbr.rel (%p420) target = $region60
        $region59: #{tpu_custom_call.1} parent=55 // pred_region
          %s423 = sand.u32 %s118, 1
          %s424 = scalar_lea.sflag [#allocation4], %s423
          %s425 = sand.u32 %s118, 1
          %s426 = scalar_lea.vmem [#allocation7], %s425
          %427 = dma.done %s424, 16
        $region60: #{tpu_custom_call.1} parent=55 // pred_fallthru
          _
        // Predicated region
        $region61: #{tpu_custom_call.1} parent=55 // pred_check
          %p428 = pneg %p161
        $region62: #{tpu_custom_call.1} parent=55 // pred_check_branch
          %430 = sbr.rel (%p428) target = $region64
        $region63: #{tpu_custom_call.1} parent=55 // pred_region
          %s431 = sand.u32 %s29, 1
          %s432 = scalar_lea.sflag [#allocation9], %s431
          %s433 = sand.u32 %s146, 1
          %s434 = scalar_lea.vmem [#allocation8], %s433
          %435 = dma.done %s432, 16
        $region64: #{tpu_custom_call.1} parent=55 // pred_fallthru
          _
        // Predicated region
        $region65: #{tpu_custom_call.1} parent=55 // pred_check
          %p436 = pneg %p189
        $region66: #{tpu_custom_call.1} parent=55 // pred_check_branch
          %438 = sbr.rel (%p436) target = $region68
        $region67: #{tpu_custom_call.1} parent=55 // pred_region
          %s439 = sand.u32 %s29, 1
          %s440 = scalar_lea.sflag [#allocation9], %s439
          %s441 = sand.u32 %s174, 1
          %s442 = scalar_lea.vmem [#allocation10], %s441
          %443 = dma.done %s440, 16
        $region68: #{tpu_custom_call.1} parent=55 // pred_fallthru
          _
      $region56: #{tpu_custom_call.1} parent=5 // pred_fallthru
        _
    $region6: #{tpu_custom_call.1} parent=1 // loop_footer
      %s27 = sadd.s32 1, %s23
    $region7: #{tpu_custom_call.1} parent=1 // loop_footer_branch
      %22 = sbr.rel target = $region3
    $region8: #{tpu_custom_call.1} parent=1 // loop_exit
      _
    %444 = vsyncpa [#allocation3], 1
    %s445 = scalar_lea.sflag [#allocation3], 1
    %446 = vsyncpa %s445, 1
    %447 = vsyncpa [#allocation6], 1
    %s448 = scalar_lea.sflag [#allocation6], 1
    %449 = vsyncpa %s448, 1
    %450 = vsyncpa [#allocation4], 1
    %s451 = scalar_lea.sflag [#allocation4], 1
    %452 = vsyncpa %s451, 1
    %453 = vsyncpa [#allocation9], 1
    %s454 = scalar_lea.sflag [#allocation9], 1
    %455 = vsyncpa %s454, 1

</llo_original>
